<compile_context>
chip_gen: v6e
topology: v6e:2x2x1
jax: 0.10.0
libtpu: 0.0.40
codegen_flags: <defaults>
</compile_context>

<pallas_src>
import functools

import jax
import jax.numpy as jnp
from jax import lax
from jax.experimental import pallas as pl
from jax.experimental.pallas import tpu as pltpu

ALPHA = 1.0
GAMMA = 2.0
_NEG_BIG = -1e30  # pad value: never wins max, exp() underflows to exactly 0


def _round_up(x, m):
    return (x + m - 1) // m * m


def _default_num_shards():
    """2 shards only on chips with >1 TensorCore per device (v4/v5p/v7x)."""
    try:
        kind = jax.devices()[0].device_kind.lower()
    except Exception:
        return 1
    return 2 if any(tag in kind for tag in ("v7", "v5p", "v4")) else 1


def _pow_gamma(base, gamma):
    """base**gamma; integer gamma lowers to VALU multiplies (no EUP pow)."""
    g = float(gamma)
    if g == int(g) and 0 <= int(g) <= 8:
        gi = int(g)
        if gi == 0:
            return jnp.ones_like(base)
        out = base
        for _ in range(gi - 1):
            out = out * base
        return out
    # Non-integer gamma: base is already clamped >= 0 by the caller.
    return jnp.power(base, jnp.float32(g))


def _focal_loss_kernel(logits_ref, tgt_ref, out_ref, acc_ref, *, alpha, gamma,
                       total_n, tile_n):
    s_id = pl.program_id(0)          # shard axis ("parallel": megacore on v7x)
    j = pl.program_id(1)             # tile-within-shard axis ("arbitrary")
    tiles_per_shard = pl.num_programs(1)

    @pl.when(j == 0)
    def _():
        acc_ref[...] = jnp.zeros_like(acc_ref)

    # Lane-dense layout: classes on sublanes, samples on lanes.
    x = logits_ref[...].astype(jnp.float32)              # (c_pad, tile_n)
    t = tgt_ref[...]                                      # (1, tile_n) int32

    # Numerically stable softmax pieces; exp(s) is the single big EUP pass.
    m = jnp.max(x, axis=0, keepdims=True)                 # (1, tile_n)
    s = x - m                                              # (c_pad, tile_n)
    es = jnp.exp(s)                                        # (c_pad, tile_n)
    sum_es = jnp.sum(es, axis=0, keepdims=True)            # (1, tile_n)

    cls = lax.broadcasted_iota(jnp.int32, x.shape, 0)      # class id per sublane
    es_tgt = jnp.sum(jnp.where(cls == t, es, 0.0), axis=0, keepdims=True)

    # Reuse exp(s): pt = softmax(x)[target]; ce = -log(pt). The clamp only
    # matters if exp(s_target) underflows to 0 in f32 (logit gap > ~87).
    pt = es_tgt / sum_es                                   # (1, tile_n), <= 1
    ce = -jnp.log(jnp.maximum(pt, jnp.float32(1e-38)))
    one_minus_pt = jnp.maximum(1.0 - pt, 0.0)              # clamp: no pow-NaN
    focal = alpha * _pow_gamma(one_minus_pt, gamma) * ce   # (1, tile_n)

    # Scalar-unit boundary test; only the (at most one) boundary tile pays for
    # the lane-iota mask, every other tile is a plain VPU accumulate.
    start = (s_id * tiles_per_shard + j) * tile_n
    remaining = total_n - start

    @pl.when(remaining >= tile_n)
    def _():
        acc_ref[...] += focal

    @pl.when(remaining < tile_n)
    def _():
        lane = lax.broadcasted_iota(jnp.int32, focal.shape, 1)
        acc_ref[...] += jnp.where(lane < remaining, focal, 0.0)

    @pl.when(j == tiles_per_shard - 1)
    def _():
        # Single cross-lane XLU reduce per shard, only on the last step.
        out_ref[...] = jnp.sum(acc_ref[...]).reshape(1, 1)


def _choose_tiling(n, num_shards, bytes_per_col, target_block_bytes=1 << 20):
    """Pick tile_n so blocks are ~1 MiB and total padding stays tiny."""
    n128 = _round_up(max(n, 1), 128)
    per_shard = _round_up(pl.cdiv(n128, num_shards), 128)
    # Largest 128-multiple lane width keeping one logits block under target.
    tile_cap = max(128, (target_block_bytes // bytes_per_col) // 128 * 128)
    tiles_per_shard = pl.cdiv(per_shard, tile_cap)
    tile_n = _round_up(pl.cdiv(per_shard, tiles_per_shard), 128)
    n_pad = num_shards * tiles_per_shard * tile_n
    return tile_n, tiles_per_shard, n_pad


def focal_loss(logits, targets, *, alpha=ALPHA, gamma=GAMMA, reduction="mean",
               num_shards=None, target_block_bytes=1 << 20):
    """Focal loss over (N, C) logits and (N,) integer targets.

    Matches the PyTorch FocalLoss forward for reduction in {'mean', 'sum'}.
    Accepts float32 or bfloat16 logits (cast to f32 inside the kernel).
    """
    n, c = logits.shape
    if num_shards is None:
        num_shards = _default_num_shards()

    sublane = 16 if logits.dtype == jnp.bfloat16 else 8
    c_pad = _round_up(c, sublane)
    itemsize = jnp.dtype(logits.dtype).itemsize
    # TODO(synk): for very large C (thousands of classes) the class axis should
    # be tiled too; this kernel targets small C (classification heads).
    tile_n, tiles_per_shard, n_pad = _choose_tiling(
        n, num_shards, c_pad * itemsize, target_block_bytes)

    # Single extra pass over the logits: (tiny) pad + transpose fuse into one
    # XLA copy; dtype is kept (cast to f32 is free inside the kernel).
    if n_pad != n or c_pad != c:
        logits = jnp.pad(logits, ((0, n_pad - n), (0, c_pad - c)),
                         constant_values=_NEG_BIG)
    logits_t = logits.T                                    # (c_pad, n_pad)

    tgt = targets.astype(jnp.int32)
    if n_pad != n:
        tgt = jnp.pad(tgt, (0, n_pad - n))
    tgt2d = tgt.reshape(1, n_pad)

    kernel = functools.partial(
        _focal_loss_kernel, alpha=float(alpha), gamma=float(gamma),
        total_n=n, tile_n=tile_n)

    partials = pl.pallas_call(
        kernel,
        out_shape=jax.ShapeDtypeStruct((num_shards, 1), jnp.float32),
        grid_spec=pltpu.PrefetchScalarGridSpec(
            num_scalar_prefetch=0,
            grid=(num_shards, tiles_per_shard),
            in_specs=[
                pl.BlockSpec((c_pad, tile_n),
                             lambda s, j: (0, s * tiles_per_shard + j)),
                pl.BlockSpec((1, tile_n),
                             lambda s, j: (0, s * tiles_per_shard + j)),
            ],
            out_specs=pl.BlockSpec((1, 1), lambda s, j: (s, 0)),
            scratch_shapes=[pltpu.VMEM((1, tile_n), jnp.float32)],
        ),
        compiler_params=pltpu.CompilerParams(
            dimension_semantics=("parallel", "arbitrary"),
            vmem_limit_bytes=48 * 1024 * 1024),
    )(logits_t, tgt2d)

    total = jnp.sum(partials)
    if reduction == "mean":
        return total / jnp.float32(n)
    elif reduction == "sum":
        return total
    # TODO(synk): reduction='none' (per-sample vector output) not implemented.
    raise NotImplementedError("reduction must be 'mean' or 'sum'")


def _focal_loss_ref(logits, targets, alpha=ALPHA, gamma=GAMMA):
    logp = jax.nn.log_softmax(logits.astype(jnp.float32), axis=-1)
    ce = -jnp.take_along_axis(logp, targets[:, None].astype(jnp.int32),
                              axis=-1)[:, 0]
    pt = jnp.exp(-ce)
    return jnp.mean(alpha * (1.0 - pt) ** gamma * ce)


if __name__ == "__main__":
    key = jax.random.PRNGKey(0)
    k1, k2, k3, k4 = jax.random.split(key, 4)

    # Aligned case: 256 samples, 16 classes.
    N, C = 256, 16
    logits = jax.random.normal(k1, (N, C), dtype=jnp.float32)
    targets = jax.random.randint(k2, (N,), 0, C, dtype=jnp.int32)
    loss = jax.block_until_ready(focal_loss(logits, targets))
    ref = _focal_loss_ref(logits, targets)
    assert jnp.allclose(loss, ref, rtol=1e-5, atol=1e-5), (loss, ref)

    # Unaligned case (exercises the boundary-tile mask path): 200 samples.
    N2 = 200
    logits2 = jax.random.normal(k3, (N2, C), dtype=jnp.float32)
    targets2 = jax.random.randint(k4, (N2,), 0, C, dtype=jnp.int32)
    loss2 = jax.block_until_ready(focal_loss(logits2, targets2))
    ref2 = _focal_loss_ref(logits2, targets2)
    assert jnp.allclose(loss2, ref2, rtol=1e-5, atol=1e-5), (loss2, ref2)

    print("KERNEL_OK")
</pallas_src>

<mosaic_0001>
module attributes {stable_mosaic.version = 11 : i64} {
  func.func @_focal_loss_kernel(%arg0: i32, %arg1: i32, %arg2: memref<16x256xf32, #tpu.memory_space<vmem>>, %arg3: memref<1x256xi32, #tpu.memory_space<vmem>>, %arg4: memref<1x1xf32, #tpu.memory_space<vmem>>, %arg5: memref<1x256xf32, #tpu.memory_space<vmem>>) attributes {dimension_semantics = [#tpu.dimension_semantics<parallel>, #tpu.dimension_semantics<arbitrary>], iteration_bounds = array<i64: 1, 1>, scalar_prefetch = 0 : i64, scratch_operands = 1 : i64, tpu.core_type = #tpu.core_type<tc>, window_params = [{transform_indices = @transform_0, window_bounds = array<i64: 16, 256>}, {transform_indices = @transform_1, window_bounds = array<i64: 1, 256>}, {transform_indices = @transform_2, window_bounds = array<i64: 1, 1>}]} {
    %c0_i32 = arith.constant 0 : i32
    %0 = arith.cmpi eq, %arg1, %c0_i32 : i32
    %1 = arith.extui %0 : i1 to i32
    %c0_i32_0 = arith.constant 0 : i32
    %2 = arith.cmpi ne, %1, %c0_i32_0 : i32
    scf.if %2 {
      %cst_19 = arith.constant 0.000000e+00 : f32
      %46 = vector.broadcast %cst_19 : f32 to vector<1x256xf32>
      %c0_20 = arith.constant 0 : index
      %c0_21 = arith.constant 0 : index
      %47 = vector.load %arg5[%c0_20, %c0_21] : memref<1x256xf32, #tpu.memory_space<vmem>>, vector<1x256xf32>
      tpu.vector_store %arg5[%c0_20, %c0_21], %46 {strides = array<i32>} : memref<1x256xf32, #tpu.memory_space<vmem>>, vector<1x256xf32>,
    } else {
    }
    %c0 = arith.constant 0 : index
    %c0_1 = arith.constant 0 : index
    %3 = vector.load %arg2[%c0, %c0_1] : memref<16x256xf32, #tpu.memory_space<vmem>>, vector<16x256xf32>
    %c0_2 = arith.constant 0 : index
    %c0_3 = arith.constant 0 : index
    %4 = vector.load %arg3[%c0_2, %c0_3] : memref<1x256xi32, #tpu.memory_space<vmem>>, vector<1x256xi32>
    %cst = arith.constant dense<0xFF800000> : vector<256xf32>
    %5 = vector.multi_reduction <maximumf>, %3, %cst [0] : vector<16x256xf32> to vector<256xf32>
    %6 = vector.shape_cast %5 : vector<256xf32> to vector<1x256xf32>
    %7 = vector.broadcast %6 : vector<1x256xf32> to vector<16x256xf32>
    %8 = arith.subf %3, %7 : vector<16x256xf32>
    %9 = math.exp %8 : vector<16x256xf32>
    %cst_4 = arith.constant dense<0.000000e+00> : vector<256xf32>
    %10 = vector.multi_reduction <add>, %9, %cst_4 [0] : vector<16x256xf32> to vector<256xf32>
    %11 = vector.shape_cast %10 : vector<256xf32> to vector<1x256xf32>
    %12 = tpu.iota {dimensions = array<i32: 0>} : vector<16x256xi32>
    %13 = vector.broadcast %4 : vector<1x256xi32> to vector<16x256xi32>
    %14 = arith.cmpi eq, %12, %13 : vector<16x256xi32>
    %cst_5 = arith.constant 0.000000e+00 : f32
    %15 = vector.broadcast %cst_5 : f32 to vector<16x256xf32>
    %16 = arith.select %14, %9, %15 : vector<16x256xi1>, vector<16x256xf32>
    %cst_6 = arith.constant dense<0.000000e+00> : vector<256xf32>
    %17 = vector.multi_reduction <add>, %16, %cst_6 [0] : vector<16x256xf32> to vector<256xf32>
    %18 = vector.shape_cast %17 : vector<256xf32> to vector<1x256xf32>
    %19 = arith.divf %18, %11 : vector<1x256xf32>
    %cst_7 = arith.constant 9.99999935E-39 : f32
    %20 = vector.broadcast %cst_7 : f32 to vector<1x256xf32>
    %21 = arith.maximumf %19, %20 : vector<1x256xf32>
    %22 = math.log %21 : vector<1x256xf32>
    %cst_8 = arith.constant 0.000000e+00 : f32
    %23 = vector.broadcast %cst_8 : f32 to vector<1x256xf32>
    %24 = arith.subf %23, %22 : vector<1x256xf32>
    %cst_9 = arith.constant 1.000000e+00 : f32
    %25 = vector.broadcast %cst_9 : f32 to vector<1x256xf32>
    %26 = arith.subf %25, %19 : vector<1x256xf32>
    %cst_10 = arith.constant 0.000000e+00 : f32
    %27 = vector.broadcast %cst_10 : f32 to vector<1x256xf32>
    %28 = arith.maximumf %26, %27 : vector<1x256xf32>
    %29 = arith.mulf %28, %28 : vector<1x256xf32>
    %cst_11 = arith.constant 1.000000e+00 : f32
    %30 = vector.broadcast %cst_11 : f32 to vector<1x256xf32>
    %31 = arith.mulf %30, %29 : vector<1x256xf32>
    %32 = arith.mulf %31, %24 : vector<1x256xf32>
    %c1_i32 = arith.constant 1 : i32
    %33 = arith.muli %arg0, %c1_i32 : i32
    %34 = arith.addi %33, %arg1 : i32
    %c256_i32 = arith.constant 256 : i32
    %35 = arith.muli %34, %c256_i32 : i32
    %c256_i32_12 = arith.constant 256 : i32
    %36 = arith.subi %c256_i32_12, %35 : i32
    %c256_i32_13 = arith.constant 256 : i32
    %37 = arith.cmpi sge, %36, %c256_i32_13 : i32
    %38 = arith.extui %37 : i1 to i32
    %c0_i32_14 = arith.constant 0 : i32
    %39 = arith.cmpi ne, %38, %c0_i32_14 : i32
    scf.if %39 {
      %c0_19 = arith.constant 0 : index
      %c0_20 = arith.constant 0 : index
      %46 = vector.load %arg5[%c0_19, %c0_20] : memref<1x256xf32, #tpu.memory_space<vmem>>, vector<1x256xf32>
      %47 = arith.addf %46, %32 : vector<1x256xf32>
      %c0_21 = arith.constant 0 : index
      %c0_22 = arith.constant 0 : index
      %48 = vector.load %arg5[%c0_21, %c0_22] : memref<1x256xf32, #tpu.memory_space<vmem>>, vector<1x256xf32>
      tpu.vector_store %arg5[%c0_21, %c0_22], %47 {strides = array<i32>} : memref<1x256xf32, #tpu.memory_space<vmem>>, vector<1x256xf32>,
    } else {
    }
    %c256_i32_15 = arith.constant 256 : i32
    %40 = arith.cmpi slt, %36, %c256_i32_15 : i32
    %41 = arith.extui %40 : i1 to i32
    %c0_i32_16 = arith.constant 0 : i32
    %42 = arith.cmpi ne, %41, %c0_i32_16 : i32
    scf.if %42 {
      %46 = tpu.iota {dimensions = array<i32: 1>} : vector<1x256xi32>
      %c0_19 = arith.constant 0 : index
      %c0_20 = arith.constant 0 : index
      %47 = vector.load %arg5[%c0_19, %c0_20] : memref<1x256xf32, #tpu.memory_space<vmem>>, vector<1x256xf32>
      %48 = vector.broadcast %36 : i32 to vector<1x256xi32>
      %49 = arith.cmpi slt, %46, %48 : vector<1x256xi32>
      %cst_21 = arith.constant 0.000000e+00 : f32
      %50 = vector.broadcast %cst_21 : f32 to vector<1x256xf32>
      %51 = arith.select %49, %32, %50 : vector<1x256xi1>, vector<1x256xf32>
      %52 = arith.addf %47, %51 : vector<1x256xf32>
      %c0_22 = arith.constant 0 : index
      %c0_23 = arith.constant 0 : index
      %53 = vector.load %arg5[%c0_22, %c0_23] : memref<1x256xf32, #tpu.memory_space<vmem>>, vector<1x256xf32>
      tpu.vector_store %arg5[%c0_22, %c0_23], %52 {strides = array<i32>} : memref<1x256xf32, #tpu.memory_space<vmem>>, vector<1x256xf32>,
    } else {
    }
    %c0_i32_17 = arith.constant 0 : i32
    %43 = arith.cmpi eq, %arg1, %c0_i32_17 : i32
    %44 = arith.extui %43 : i1 to i32
    %c0_i32_18 = arith.constant 0 : i32
    %45 = arith.cmpi ne, %44, %c0_i32_18 : i32
    scf.if %45 {
      %c0_19 = arith.constant 0 : index
      %c0_20 = arith.constant 0 : index
      %46 = vector.load %arg5[%c0_19, %c0_20] : memref<1x256xf32, #tpu.memory_space<vmem>>, vector<1x256xf32>
      %47 = vector.shape_cast %46 : vector<1x256xf32> to vector<1x1x256xf32>
      %cst_21 = arith.constant dense<0.000000e+00> : vector<1xf32>
      %48 = vector.multi_reduction <add>, %47, %cst_21 [1, 2] : vector<1x1x256xf32> to vector<1xf32>
      %49 = vector.shape_cast %48 : vector<1xf32> to vector<1x1x1xf32>
      %50 = vector.extract %49[0, 0, 0] : f32 from vector<1x1x1xf32>
      %51 = vector.broadcast %50 : f32 to vector<1x1xf32>
      %c0_22 = arith.constant 0 : index
      %c0_23 = arith.constant 0 : index
      %52 = vector.load %arg4[%c0_22, %c0_23] : memref<1x1xf32, #tpu.memory_space<vmem>>, vector<1x1xf32>
      tpu.vector_store %arg4[%c0_22, %c0_23], %51 {strides = array<i32>} : memref<1x1xf32, #tpu.memory_space<vmem>>, vector<1x1xf32>,
    } else {
    }
    return
  }
  func.func @transform_0(%arg0: i32, %arg1: i32) -> (i32, i32) {
    %c1_i32 = arith.constant 1 : i32
    %0 = arith.muli %arg0, %c1_i32 : i32
    %1 = arith.addi %0, %arg1 : i32
    %c0_i32 = arith.constant 0 : i32
    %c0_i32_0 = arith.constant 0 : i32
    return %c0_i32, %1 : i32, i32
  }
  func.func @transform_1(%arg0: i32, %arg1: i32) -> (i32, i32) {
    %c1_i32 = arith.constant 1 : i32
    %0 = arith.muli %arg0, %c1_i32 : i32
    %1 = arith.addi %0, %arg1 : i32
    %c0_i32 = arith.constant 0 : i32
    %c0_i32_0 = arith.constant 0 : i32
    return %c0_i32, %1 : i32, i32
  }
  func.func @transform_2(%arg0: i32, %arg1: i32) -> (i32, i32) {
    %c0_i32 = arith.constant 0 : i32
    %c0_i32_0 = arith.constant 0 : i32
    return %arg0, %c0_i32 : i32, i32
  }
}

</mosaic_0001>

<llo_original>
// kernel: tpu_custom_call.1
$region0: #{tpu_custom_call.1}
  #allocation0 [shape = 'u32[]', space=smem, size = 0x4, offset = 0x4, fixed_abs, tag = 'smem constant byte address 0x4 - core index']
  #allocation1 [shape = 'u32[144,128]{1,0:T(1,128)}', space=vmem, size = 0x12000, scoped, tag = 'internal scratch']
  #allocation2 [shape = 'f32[1,256]{1,0:T(1,128)}', space=vmem, size = 0x400, scoped, tag = 'scratch operand']
  %s0 = inlined_call_operand.hbm [shape: f32[16,256], index: 0, kind: input, shape index: {}]
  %s1 = inlined_call_operand.hbm [shape: s32[1,256], index: 1, kind: input, shape index: {}]
  %s2 = inlined_call_operand.hbm [shape: f32[1,1], index: 2, kind: output, shape index: {}]
  %s3 = sld [smem:[#allocation0]]
  $region42: #{tpu_custom_call.1} parent=0
    _
  %s5 = ssub.s32 1, %s3
  %s6 = scalar_select 0, %s5, %s3
  $region1: #{tpu_custom_call.1} parent=0
    #allocation3 [shape = 'u8[16384]{0}', space=vmem, size = 0x4000, scoped, tag = 'input window, operand 0, single buffered']
    #allocation4 [shape = 's32[1]{0}', space=sflag, size = 0x4, scoped, tag = 'scoped memory for tpu_custom_call.1']
    #allocation5 [shape = 's32[1]{0}', space=sflag, size = 0x4, scoped, tag = 'scoped memory for tpu_custom_call.1']
    #allocation6 [shape = 'u8[1024]{0}', space=vmem, size = 0x400, scoped, tag = 'input window, operand 1, single buffered']
    #allocation7 [shape = 's32[1]{0}', space=sflag, size = 0x4, scoped, tag = 'scoped memory for tpu_custom_call.1']
    #allocation8 [shape = 'u8[512]{0}', space=vmem, size = 0x400, scoped, tag = 'output window, operand 0, single buffered']
    %7 = vsyncpa [#allocation4], 0
    %8 = vsyncpa [#allocation7], 0
    %9 = vsyncpa [#allocation5], 0
    // Predicated region
    $region2: #{tpu_custom_call.1} parent=1 // pred_check
      _
    $region3: #{tpu_custom_call.1} parent=1 // pred_check_branch
      %11 = sbr.rel (0) target = $region5
    $region4: #{tpu_custom_call.1} parent=1 // pred_region
      %s12 = sadd.s32 0, 0
      %s13 = smul.u32 2, %s12
      %s15 = ssub.s32 512, 512
      %16 = vsyncadd [#allocation4], %s15
      %s17 = smul.addr %s13, 128
      %s18 = scalar_lea.hbm %s0, %s17
      %s19 = sshll.u32 [#allocation3], 4
      %s20 = int_to_ptr.vmem [resolvable:$true] %s19
      %25 = dma.hbm_to_vmem [thread:$0]  %s18, 512, %s20, [#allocation4], 256, 256, 16
    $region5: #{tpu_custom_call.1} parent=1 // pred_fallthru
      _
    // Predicated region
    $region6: #{tpu_custom_call.1} parent=1 // pred_check
      _
    $region7: #{tpu_custom_call.1} parent=1 // pred_check_branch
      %27 = sbr.rel (0) target = $region9
    $region8: #{tpu_custom_call.1} parent=1 // pred_region
      %s28 = sadd.s32 0, 0
      %s29 = smul.u32 2, %s28
      %s31 = ssub.s32 32, 32
      %32 = vsyncadd [#allocation7], %s31
      %s33 = smul.addr %s29, 16
      %s34 = scalar_lea.hbm %s1, %s33
      %s36 = sshll.u32 [#allocation6], 4
      %s37 = int_to_ptr.vmem [resolvable:$true] %s36
      %39 = dma.hbm_to_vmem [thread:$0]  %s34, 32, %s37, [#allocation7]
    $region9: #{tpu_custom_call.1} parent=1 // pred_fallthru
      _
    // Predicated region
    $region10: #{tpu_custom_call.1} parent=1 // pred_check
      _
    $region11: #{tpu_custom_call.1} parent=1 // pred_check_branch
      %41 = sbr.rel (0) target = $region13
    $region12: #{tpu_custom_call.1} parent=1 // pred_region
      %42 = dma.done [#allocation4], 512
    $region13: #{tpu_custom_call.1} parent=1 // pred_fallthru
      _
    // Predicated region
    $region14: #{tpu_custom_call.1} parent=1 // pred_check
      _
    $region15: #{tpu_custom_call.1} parent=1 // pred_check_branch
      %44 = sbr.rel (0) target = $region17
    $region16: #{tpu_custom_call.1} parent=1 // pred_region
      %45 = dma.done [#allocation7], 32
    $region17: #{tpu_custom_call.1} parent=1 // pred_fallthru
      _
    %s46 = sadd.s32 0, 0
    %s47 = smul.u32 2, %s46
    %s48 = sadd.s32 0, 0
    %s49 = smul.u32 2, %s48
    %p50 = scmp.eq.s32.totalorder 0, 0
    // Predicated region
    $region18: #{tpu_custom_call.1} parent=1 // pred_check
      %p51 = pneg %p50
    $region19: #{tpu_custom_call.1} parent=1 // pred_check_branch
      %53 = sbr.rel (%p51) target = $region21
    $region20: #{tpu_custom_call.1} parent=1 // pred_region
      %v54 = vlaneseq
      %vm55 = vcmp.ge.s32.totalorder %v54, 0
      %vm56 = vcmp.lt.s32.totalorder %v54, 256
      %vm57 = vmand %vm55, %vm56
      %58 = vst.msk [vmem:[#allocation2] sm:$0x3] %vm57, 0.0
    $region21: #{tpu_custom_call.1} parent=1 // pred_fallthru
      _
    %v59 = vld [vmem:[#allocation3] sm:$0xff]
    %v60 = vld [vmem:[#allocation3 + $0x8] sm:$0xff]
    %v61 = vld [vmem:[#allocation3 + $0x10] sm:$0xff]
    %v62 = vld [vmem:[#allocation3 + $0x18] sm:$0xff]
    %v63 = vld [vmem:[#allocation6] sm:$0x3]
    %v64 = vmax.f32 %v59, %v61
    %v65 = vrot.slane %v64, 4
    %v66 = vmax.f32 %v64, %v65
    %v67 = vrot.slane %v66, 2
    %v68 = vmax.f32 %v66, %v67
    %v69 = vrot.slane %v68, 1
    %v70 = vmax.f32 %v68, %v69
    %v71 = vmax.f32 %v60, %v62
    %v72 = vrot.slane %v71, 4
    %v73 = vmax.f32 %v71, %v72
    %v74 = vrot.slane %v73, 2
    %v75 = vmax.f32 %v73, %v74
    %v76 = vrot.slane %v75, 1
    %v77 = vmax.f32 %v75, %v76
    %v78 = vsub.f32 %v59, %v70
    %v79 = vsub.f32 %v60, %v77
    %v80 = vsub.f32 %v61, %v70
    %v81 = vsub.f32 %v62, %v77
    %v82 = vmul.f32 %v78, 1.442695
    %v83 = vpow.pop %v82
    %v84 = vmul.f32 %v79, 1.442695
    %v85 = vpow.pop %v84
    %v86 = vmul.f32 %v80, 1.442695
    %v87 = vpow.pop %v86
    %v88 = vmul.f32 %v81, 1.442695
    %v89 = vpow.pop %v88
    %v90 = vadd.f32 %v83, %v87
    %v91 = vrot.slane %v90, 4
    %v92 = vadd.f32 %v90, %v91
    %v93 = vrot.slane %v92, 2
    %v94 = vadd.f32 %v92, %v93
    %v95 = vrot.slane %v94, 1
    %v96 = vadd.f32 %v94, %v95
    %v97 = vadd.f32 %v85, %v89
    %v98 = vrot.slane %v97, 4
    %v99 = vadd.f32 %v97, %v98
    %v100 = vrot.slane %v99, 2
    %v101 = vadd.f32 %v99, %v100
    %v102 = vrot.slane %v101, 1
    %v103 = vadd.f32 %v101, %v102
    %v104 = vlaneseq
    %v105 = vshrl.u32 %v104, 7
    %v106 = vadd.s32 %v105, 8
    %v107 = vlaneseq
    %v108 = vshrl.u32 %v107, 7
    %v109 = vsub.s32 0, %v108
    %v110 = vrot.slane %v63, %v109
    %v111 = vlaneseq
    %v112 = vshrl.u32 %v111, 7
    %v113 = vsub.s32 1, %v112
    %v114 = vrot.slane %v63, %v113
    %vm115 = vcmp.eq.s32.totalorder %v105, %v110
    %vm116 = vcmp.eq.s32.totalorder %v105, %v114
    %vm117 = vcmp.eq.s32.totalorder %v106, %v110
    %vm118 = vcmp.eq.s32.totalorder %v106, %v114
    %v119 = vsel %vm115, %v83, 0.0
    %v120 = vsel %vm116, %v85, 0.0
    %v121 = vsel %vm117, %v87, 0.0
    %v122 = vsel %vm118, %v89, 0.0
    %v123 = vadd.f32 %v119, %v121
    %v124 = vrot.slane %v123, 4
    %v125 = vadd.f32 %v123, %v124
    %v126 = vrot.slane %v125, 2
    %v127 = vadd.f32 %v125, %v126
    %v128 = vrot.slane %v127, 1
    %v129 = vadd.f32 %v127, %v128
    %v130 = vadd.f32 %v120, %v122
    %v131 = vrot.slane %v130, 4
    %v132 = vadd.f32 %v130, %v131
    %v133 = vrot.slane %v132, 2
    %v134 = vadd.f32 %v132, %v133
    %v135 = vrot.slane %v134, 1
    %v136 = vadd.f32 %v134, %v135
    %v137 = vrcp.pop %v96
    %v138 = vmul.f32 %v129, %v137
    %v139 = vrcp.pop %v103
    %v140 = vmul.f32 %v136, %v139
    %v141 = vmax.f32 %v138, 1e-38
    %v142 = vmax.f32 %v140, 1e-38
    %v143 = vlog2.pop %v141
    %v144 = vmul.f32 %v143, 0.6931472
    %v145 = vlog2.pop %v142
    %v146 = vmul.f32 %v145, 0.6931472
    %v147 = vsub.f32 0.0, %v144
    %v148 = vsub.f32 0.0, %v146
    %v149 = vsub.f32 1.0, %v138
    %v150 = vsub.f32 1.0, %v140
    %v151 = vmax.f32 %v149, 0.0
    %v152 = vmax.f32 %v150, 0.0
    %v153 = vmul.f32 %v151, %v151
    %v154 = vmul.f32 %v152, %v152
    %v155 = vmul.f32 %v153, %v147
    %v156 = vmul.f32 %v154, %v148
    %s157 = sadd.s32 0, 0
    %s158 = smul.u32 %s157, 256
    %s159 = ssub.s32 256, %s158
    %p160 = scmp.ge.s32.totalorder %s159, 256
    // Predicated region
    $region22: #{tpu_custom_call.1} parent=1 // pred_check
      %p161 = pneg %p160
    $region23: #{tpu_custom_call.1} parent=1 // pred_check_branch
      %163 = sbr.rel (%p161) target = $region25
    $region24: #{tpu_custom_call.1} parent=1 // pred_region
      %v164 = vld [vmem:[#allocation2] sm:$0x3]
      %v167 = vcombine.low %v155, %v156
      %v169 = vunpack.c.l.s4 1966171168
      %v170 = vunpack.c.0.s8 %v169
      %v171 = vlaneseq
      %v172 = vshrl.u32 %v171, 7
      %v173 = vsub.s32 %v170, %v172
      %v174 = vrot.slane %v167, %v173
      %v176 = vunpack.c.l.s4 1966171168
      %v177 = vunpack.c.0.s8 %v176
      %v178 = vlaneseq
      %v179 = vshrl.u32 %v178, 7
      %v180 = vsub.s32 %v177, %v179
      %v181 = vrot.slane %v174, %v180
      %v183 = vadd.f32 %v164, %v181
      %v184 = vlaneseq
      %vm185 = vcmp.ge.s32.totalorder %v184, 0
      %vm186 = vcmp.lt.s32.totalorder %v184, 256
      %vm187 = vmand %vm185, %vm186
      %188 = vst.msk [vmem:[#allocation2] sm:$0x3] %vm187, %v183
    $region25: #{tpu_custom_call.1} parent=1 // pred_fallthru
      _
    %p189 = scmp.lt.s32.totalorder %s159, 256
    // Predicated region
    $region26: #{tpu_custom_call.1} parent=1 // pred_check
      %p190 = pneg %p189
    $region27: #{tpu_custom_call.1} parent=1 // pred_check_branch
      %192 = sbr.rel (%p190) target = $region29
    $region28: #{tpu_custom_call.1} parent=1 // pred_region
      %v193 = vlaneseq
      %v194 = vand.u32 %v193, 127
      %v195 = vadd.s32 %v194, 128
      %v196 = vld [vmem:[#allocation2] sm:$0x3]
      %v197 = vstv %s159
      %vm198 = vcmp.lt.s32.totalorder %v194, %v197
      %vm199 = vcmp.lt.s32.totalorder %v195, %v197
      %v200 = vsel %vm198, %v155, 0.0
      %v201 = vsel %vm199, %v156, 0.0
      %v204 = vcombine.low %v200, %v201
      %v206 = vunpack.c.l.s4 1966171168
      %v207 = vunpack.c.0.s8 %v206
      %v208 = vlaneseq
      %v209 = vshrl.u32 %v208, 7
      %v210 = vsub.s32 %v207, %v209
      %v211 = vrot.slane %v204, %v210
      %v213 = vunpack.c.l.s4 1966171168
      %v214 = vunpack.c.0.s8 %v213
      %v215 = vlaneseq
      %v216 = vshrl.u32 %v215, 7
      %v217 = vsub.s32 %v214, %v216
      %v218 = vrot.slane %v211, %v217
      %v220 = vadd.f32 %v196, %v218
      %v221 = vlaneseq
      %vm222 = vcmp.ge.s32.totalorder %v221, 0
      %vm223 = vcmp.lt.s32.totalorder %v221, 256
      %vm224 = vmand %vm222, %vm223
      %225 = vst.msk [vmem:[#allocation2] sm:$0x3] %vm224, %v220
    $region29: #{tpu_custom_call.1} parent=1 // pred_fallthru
      _
    // Predicated region
    $region30: #{tpu_custom_call.1} parent=1 // pred_check
      %p226 = pneg %p50
    $region31: #{tpu_custom_call.1} parent=1 // pred_check_branch
      %228 = sbr.rel (%p226) target = $region33
    $region32: #{tpu_custom_call.1} parent=1 // pred_region
      %v229 = vld [vmem:[#allocation2] sm:$0x3]
      %v231 = vlaneseq
      %v232 = vshrl.u32 %v231, 7
      %v233 = vsub.s32 0, %v232
      %v234 = vrot.slane %v229, %v233
      %v235 = vlaneseq
      %v236 = vshrl.u32 %v235, 7
      %v237 = vsub.s32 1, %v236
      %v238 = vrot.slane %v229, %v237
      %vm241 = vcmask 1040384
      %v242 = vsel %vm241, %v234, 0.0
      %v243 = vsel %vm241, %v238, 0.0
      %v244 = vadd.f32 %v242, %v243
      %245 = vadd.xlane.f32.xlu0 %v244
      %v246 = vpop.xlane.xlu0 %245
      %v247 = vrot.slane %v246, 4
      %v248 = vadd.f32 %v246, %v247
      %v249 = vrot.slane %v248, 2
      %v250 = vadd.f32 %v248, %v249
      %v251 = vrot.slane %v250, 1
      %v252 = vadd.f32 %v250, %v251
      %s253 = vtos %v252
      %v254 = vstv %s253
      %vm255 = vcmask 0
      %256 = vst.msk [vmem:[#allocation8] sm:$0x1] %vm255, %v254
    $region33: #{tpu_custom_call.1} parent=1 // pred_fallthru
      _
    // Predicated region
    $region34: #{tpu_custom_call.1} parent=1 // pred_check
      _
    $region35: #{tpu_custom_call.1} parent=1 // pred_check_branch
      %258 = sbr.rel (0) target = $region37
    $region36: #{tpu_custom_call.1} parent=1 // pred_region
      %s260 = ssub.s32 16, 16
      %261 = vsyncadd [#allocation5], %s260
      %s263 = sshll.u32 [#allocation8], 4
      %s264 = int_to_ptr.vmem [resolvable:$true] %s263
      %266 = dma.vmem_to_hbm [thread:$0]  %s264, 16, %s2, [#allocation5]
    $region37: #{tpu_custom_call.1} parent=1 // pred_fallthru
      _
    // Predicated region
    $region38: #{tpu_custom_call.1} parent=1 // pred_check
      _
    $region39: #{tpu_custom_call.1} parent=1 // pred_check_branch
      %268 = sbr.rel (0) target = $region41
    $region40: #{tpu_custom_call.1} parent=1 // pred_region
      %269 = dma.done [#allocation5], 16
    $region41: #{tpu_custom_call.1} parent=1 // pred_fallthru
      _
    %270 = vsyncpa [#allocation4], 1
    %271 = vsyncpa [#allocation7], 1
    %272 = vsyncpa [#allocation5], 1

</llo_original>
